<compile_context>
chip_gen: v6e
topology: v6e:2x2x1
jax: 0.10.0
libtpu: 0.0.40
codegen_flags: <defaults>
</compile_context>

<pallas_src>
import jax
import jax.numpy as jnp
from jax.experimental import pallas as pl
from jax.experimental.pallas import tpu as pltpu

_LANES = 128


def _rescale_kernel(scale_ref, shift_ref, x_ref, o_ref):
    # scale_ref / shift_ref: (1,) scalars in SMEM
    # x_ref / o_ref: (block_rows, 128) lane-dense tiles in VMEM
    o_ref[...] = x_ref[...] * scale_ref[0] + shift_ref[0]


def rescale(x: jax.Array, scale: jax.Array, shift: jax.Array, *, tile_rows: int = 1024) -> jax.Array:
    """out = x * scale + shift (elementwise, scalar scale/shift).

    x:     [num_atoms, 1] float32 (any shape works; treated elementwise)
    scale: [1]            float32
    shift: [1]            float32
    """
    orig_shape = x.shape
    n = x.size
    flat = x.reshape(-1)

    # Lane-dense view: ceil(n / 128) rows of 128 lanes.
    rows_needed = -(-n // _LANES)
    if rows_needed <= tile_rows:
        # Single block covering the whole (small) array; no pipeline needed.
        block_rows = max(rows_needed, 1)
        rows = block_rows
    else:
        # Pad the row count to a multiple of the (8,128)-aligned tile.
        block_rows = tile_rows
        rows = -(-rows_needed // tile_rows) * tile_rows
    grid = (rows // block_rows,)

    padded_n = rows * _LANES
    if padded_n != n:
        flat = jnp.pad(flat, (0, padded_n - n))
    x2d = flat.reshape(rows, _LANES)

    out2d = pl.pallas_call(
        _rescale_kernel,
        out_shape=jax.ShapeDtypeStruct((rows, _LANES), x.dtype),
        grid=grid,
        in_specs=[
            pl.BlockSpec(memory_space=pltpu.MemorySpace.SMEM),     # scale
            pl.BlockSpec(memory_space=pltpu.MemorySpace.SMEM),     # shift
            pl.BlockSpec((block_rows, _LANES), lambda i: (i, 0)),  # x tiles
        ],
        out_specs=pl.BlockSpec((block_rows, _LANES), lambda i: (i, 0)),
        compiler_params=pltpu.CompilerParams(
            dimension_semantics=("parallel",),
        ),
    )(scale, shift, x2d)

    # Slice off padding so `shift`-valued pad rows never leak to the caller.
    return out2d.reshape(-1)[:n].reshape(orig_shape)


if __name__ == "__main__":
    # Deterministic parameter init (module __init__ takes float shift/scale).
    shift_val = 0.5
    scale_val = 2.0
    scale = jnp.asarray([scale_val], dtype=jnp.float32)
    shift = jnp.asarray([shift_val], dtype=jnp.float32)

    key = jax.random.PRNGKey(0)
    k1, k2 = jax.random.split(key)

    # Case 1: small atom count, not a multiple of 128 -> single-block path
    # with wrapper-side padding + slice-back.
    x1 = jax.random.normal(k1, (300, 1), dtype=jnp.float32)
    out1 = jax.block_until_ready(rescale(x1, scale, shift))
    ref1 = x1 * scale_val + shift_val
    assert out1.shape == x1.shape and out1.dtype == x1.dtype
    assert jnp.allclose(out1, ref1, atol=1e-6, rtol=1e-6)

    # Case 2: force the multi-step pipelined grid path with a small tile.
    x2 = jax.random.normal(k2, (3000, 1), dtype=jnp.float32)
    out2 = jax.block_until_ready(rescale(x2, scale, shift, tile_rows=8))
    ref2 = x2 * scale_val + shift_val
    assert out2.shape == x2.shape and out2.dtype == x2.dtype
    assert jnp.allclose(out2, ref2, atol=1e-6, rtol=1e-6)

    print("KERNEL_OK")
</pallas_src>

<mosaic_0001>
module attributes {stable_mosaic.version = 11 : i64} {
  func.func @_rescale_kernel(%arg0: i32, %arg1: memref<1xf32, #tpu.memory_space<smem>>, %arg2: memref<1xf32, #tpu.memory_space<smem>>, %arg3: memref<3x128xf32, #tpu.memory_space<vmem>>, %arg4: memref<3x128xf32, #tpu.memory_space<vmem>>) attributes {dimension_semantics = [#tpu.dimension_semantics<parallel>], iteration_bounds = array<i64: 1>, scalar_prefetch = 0 : i64, scratch_operands = 0 : i64, tpu.core_type = #tpu.core_type<tc>, window_params = [{transform_indices = @transform_0, window_bounds = array<i64: 1>}, {transform_indices = @transform_1, window_bounds = array<i64: 1>}, {transform_indices = @transform_2, window_bounds = array<i64: 3, 128>}, {transform_indices = @transform_3, window_bounds = array<i64: 3, 128>}]} {
    %c0 = arith.constant 0 : index
    %c0_0 = arith.constant 0 : index
    %0 = vector.load %arg3[%c0, %c0_0] : memref<3x128xf32, #tpu.memory_space<vmem>>, vector<3x128xf32>
    %c0_1 = arith.constant 0 : index
    %1 = memref.load %arg1[%c0_1] : memref<1xf32, #tpu.memory_space<smem>>
    %2 = vector.broadcast %1 : f32 to vector<3x128xf32>
    %3 = arith.mulf %0, %2 : vector<3x128xf32>
    %c0_2 = arith.constant 0 : index
    %4 = memref.load %arg2[%c0_2] : memref<1xf32, #tpu.memory_space<smem>>
    %5 = vector.broadcast %4 : f32 to vector<3x128xf32>
    %6 = arith.addf %3, %5 : vector<3x128xf32>
    %c0_3 = arith.constant 0 : index
    %c0_4 = arith.constant 0 : index
    %7 = vector.load %arg4[%c0_3, %c0_4] : memref<3x128xf32, #tpu.memory_space<vmem>>, vector<3x128xf32>
    tpu.vector_store %arg4[%c0_3, %c0_4], %6 {strides = array<i32>} : memref<3x128xf32, #tpu.memory_space<vmem>>, vector<3x128xf32>,
    return
  }
  func.func @transform_0(%arg0: i32) -> i32 {
    %c0_i32 = arith.constant 0 : i32
    %c0_i32_0 = arith.constant 0 : i32
    return %c0_i32 : i32
  }
  func.func @transform_1(%arg0: i32) -> i32 {
    %c0_i32 = arith.constant 0 : i32
    %c0_i32_0 = arith.constant 0 : i32
    return %c0_i32 : i32
  }
  func.func @transform_2(%arg0: i32) -> (i32, i32) {
    %c0_i32 = arith.constant 0 : i32
    %c0_i32_0 = arith.constant 0 : i32
    return %arg0, %c0_i32 : i32, i32
  }
  func.func @transform_3(%arg0: i32) -> (i32, i32) {
    %c0_i32 = arith.constant 0 : i32
    %c0_i32_0 = arith.constant 0 : i32
    return %arg0, %c0_i32 : i32, i32
  }
}

</mosaic_0001>

<llo_original>
// kernel: tpu_custom_call.1
$region0: #{tpu_custom_call.1}
  #allocation0 [shape = 'u32[]', space=smem, size = 0x4, offset = 0x4, fixed_abs, tag = 'smem constant byte address 0x4 - core index']
  #allocation1 [shape = 'u32[144,128]{1,0:T(1,128)}', space=vmem, size = 0x12000, scoped, tag = 'internal scratch']
  #allocation2 [shape = 'f32[1]{0:T(128)S(6)}', space=smem, size = 0x200, scoped, tag = 'scoped memory for tpu_custom_call.1']
  #allocation3 [shape = 'f32[1]{0:T(128)S(6)}', space=smem, size = 0x200, scoped, tag = 'scoped memory for tpu_custom_call.1']
  %s0 = inlined_call_operand.<no memory space> [shape: f32[1], index: 0, kind: input, shape index: {}]
  %s1 = inlined_call_operand.<no memory space> [shape: f32[1], index: 1, kind: input, shape index: {}]
  %s2 = inlined_call_operand.vmem [shape: f32[3,128], index: 2, kind: input, shape index: {}]
  %s3 = inlined_call_operand.hbm [shape: f32[3,128], index: 3, kind: output, shape index: {}]
  %s4 = sld [smem:[#allocation0]]
  $region22: #{tpu_custom_call.1} parent=0
    _
  %s6 = ssub.s32 1, %s4
  %s7 = scalar_select 0, %s6, %s4
  %8 = sst [smem:[#allocation2]] %s0
  %9 = sst [smem:[#allocation3]] %s1
  $region1: #{tpu_custom_call.1} parent=0
    #allocation4 [shape = 'u8[2048]{0}', space=vmem, size = 0x800, scoped, tag = 'output window, operand 0, single buffered']
    #allocation5 [shape = 's32[1]{0}', space=sflag, size = 0x4, scoped, tag = 'scoped memory for tpu_custom_call.1']
    %10 = vsyncpa [#allocation5], 0
    // Predicated region
    $region2: #{tpu_custom_call.1} parent=1 // pred_check
      _
    $region3: #{tpu_custom_call.1} parent=1 // pred_check_branch
      %12 = sbr.rel (0) target = $region5
    $region4: #{tpu_custom_call.1} parent=1 // pred_region
      _
    $region5: #{tpu_custom_call.1} parent=1 // pred_fallthru
      _
    // Predicated region
    $region6: #{tpu_custom_call.1} parent=1 // pred_check
      _
    $region7: #{tpu_custom_call.1} parent=1 // pred_check_branch
      %14 = sbr.rel (0) target = $region9
    $region8: #{tpu_custom_call.1} parent=1 // pred_region
      _
    $region9: #{tpu_custom_call.1} parent=1 // pred_fallthru
      _
    // Predicated region
    $region10: #{tpu_custom_call.1} parent=1 // pred_check
      _
    $region11: #{tpu_custom_call.1} parent=1 // pred_check_branch
      %16 = sbr.rel (0) target = $region13
    $region12: #{tpu_custom_call.1} parent=1 // pred_region
      _
    $region13: #{tpu_custom_call.1} parent=1 // pred_fallthru
      _
    %v17 = vld [vmem:[%s2] sm:$0x7]
    %s18 = sld [smem:[#allocation2]]
    %v19 = vstv %s18
    %v20 = vmul.f32 %v17, %v19
    %s21 = sld [smem:[#allocation3]]
    %v22 = vstv %s21
    %v23 = vadd.f32 %v20, %v22
    %24 = vst [vmem:[#allocation4] sm:$0x7] %v23
    // Predicated region
    $region14: #{tpu_custom_call.1} parent=1 // pred_check
      _
    $region15: #{tpu_custom_call.1} parent=1 // pred_check_branch
      %26 = sbr.rel (0) target = $region17
    $region16: #{tpu_custom_call.1} parent=1 // pred_region
      %s28 = ssub.s32 64, 64
      %29 = vsyncadd [#allocation5], %s28
      %s31 = sshll.u32 [#allocation4], 4
      %s32 = int_to_ptr.vmem [resolvable:$true] %s31
      %34 = dma.vmem_to_hbm [thread:$0]  %s32, 64, %s3, [#allocation5]
    $region17: #{tpu_custom_call.1} parent=1 // pred_fallthru
      _
    // Predicated region
    $region18: #{tpu_custom_call.1} parent=1 // pred_check
      _
    $region19: #{tpu_custom_call.1} parent=1 // pred_check_branch
      %36 = sbr.rel (0) target = $region21
    $region20: #{tpu_custom_call.1} parent=1 // pred_region
      %37 = dma.done [#allocation5], 64
    $region21: #{tpu_custom_call.1} parent=1 // pred_fallthru
      _
    %38 = vsyncpa [#allocation5], 1

</llo_original>
